<compile_context>
chip_gen: v5e
topology: v5e:2x2
jax: 0.10.0
libtpu: 0.0.40
codegen_flags: <defaults>
</compile_context>

<pallas_src>
import math
import functools

import jax
import jax.numpy as jnp
from jax import lax
from jax.experimental import pallas as pl
from jax.experimental.pallas import tpu as pltpu

_LANE = 128  # width of the halo views (one lane-granule block of x)


def _conv_tile(win, w2_ref, b_ref, t_out, kernel_size, dilation, out_dtype):
    """win: (C_in, t_out + dilation*(K-1)) -> (C_out, t_out)."""
    taps = [win[:, k * dilation: k * dilation + t_out] for k in range(kernel_size)]
    xcat = taps[0] if kernel_size == 1 else jnp.concatenate(taps, axis=0)  # (K*C_in, t_out)
    acc = jnp.dot(w2_ref[...], xcat, preferred_element_type=jnp.float32)   # MXU, (C_out, t_out)
    acc = acc + b_ref[...].astype(jnp.float32)                             # (C_out, 1) broadcast
    return acc.astype(out_dtype)


def _kernel_single(x_ref, w2_ref, b_ref, o_ref, *, kernel_size, dilation, pad):
    # x_ref: (1, C_in, L)   w2_ref: (C_out, K*C_in)   b_ref: (C_out, 1)
    # o_ref: (1, C_out, L_out)
    c_in = x_ref.shape[1]
    t_out = o_ref.shape[2]
    x = x_ref[0]
    if pad > 0:
        win = jnp.concatenate([jnp.zeros((c_in, pad), x.dtype), x], axis=-1)
    else:
        win = x
    o_ref[0] = _conv_tile(win, w2_ref, b_ref, t_out, kernel_size, dilation, o_ref.dtype)


def _kernel_tiled(xl_ref, xc_ref, xr_ref, w2_ref, b_ref, o_ref, *,
                  kernel_size, dilation, pad):
    # xl_ref/xr_ref: (1, C_in, 128) halo views   xc_ref: (1, C_in, TL)
    # o_ref: (1, C_out, TL)
    j = pl.program_id(1)
    t_out = o_ref.shape[2]
    halo = dilation * (kernel_size - 1)
    right = halo - pad

    parts = []
    if pad > 0:
        tail = xl_ref[0, :, xl_ref.shape[2] - pad:]             # last `pad` cols of prev block
        tail = jnp.where(j > 0, tail, jnp.zeros_like(tail))     # causal zero-pad at seq start
        parts.append(tail)
    parts.append(xc_ref[0])                                     # the tile itself
    if right > 0:
        parts.append(xr_ref[0, :, :right])                      # first cols of next block
    win = parts[0] if len(parts) == 1 else jnp.concatenate(parts, axis=-1)
    o_ref[0] = _conv_tile(win, w2_ref, b_ref, t_out, kernel_size, dilation, o_ref.dtype)


def causal_conv1d(x, weight, bias, *, dilation=1, seq_tile=512):
    """x: (N, C_in, L), weight: (C_out, C_in, K), bias: (C_out,) -> (N, C_out, L_out)."""
    n, c_in, l = x.shape
    c_out, c_in_w, k = weight.shape
    assert c_in_w == c_in
    halo = dilation * (k - 1)
    pad = halo // 2
    right = halo - pad
    l_out = l + pad - halo
    assert l_out > 0, "sequence shorter than receptive field"

    # Tiny one-off parameter reshapes (negligible HBM):
    #   weight -> (C_out, K*C_in), row order matching the im2col [k major, ci minor].
    w2 = jnp.transpose(weight, (0, 2, 1)).reshape(c_out, k * c_in)
    b2 = bias.reshape(c_out, 1)

    w_spec = pl.BlockSpec((c_out, k * c_in), lambda *_: (0, 0))
    b_spec = pl.BlockSpec((c_out, 1), lambda *_: (0, 0))
    vmem_limit = 32 * 1024 * 1024  # safe on v5e/v6e/v7x; tiles here are << this

    use_tiled = (
        l_out > seq_tile
        and seq_tile % _LANE == 0
        and pad <= _LANE
        and right <= _LANE
    )

    if not use_tiled:
        kern = functools.partial(_kernel_single, kernel_size=k, dilation=dilation, pad=pad)
        return pl.pallas_call(
            kern,
            out_shape=jax.ShapeDtypeStruct((n, c_out, l_out), x.dtype),
            grid=(n,),
            in_specs=[
                pl.BlockSpec((1, c_in, l), lambda i: (i, 0, 0)),
                w_spec,
                b_spec,
            ],
            out_specs=pl.BlockSpec((1, c_out, l_out), lambda i: (i, 0, 0)),
            compiler_params=pltpu.CompilerParams(
                dimension_semantics=("parallel",),
                vmem_limit_bytes=vmem_limit,
            ),
        )(x, w2, b2)

    tl_ = seq_tile
    nt = pl.cdiv(l_out, tl_)
    r = tl_ // _LANE                 # tile width measured in 128-col blocks of x
    nsp = pl.cdiv(l, _LANE)          # number of 128-col blocks of x

    kern = functools.partial(_kernel_tiled, kernel_size=k, dilation=dilation, pad=pad)
    return pl.pallas_call(
        kern,
        out_shape=jax.ShapeDtypeStruct((n, c_out, l_out), x.dtype),
        grid=(n, nt),
        in_specs=[
            # 128-wide block just left of the tile (its last `pad` cols are the left halo).
            # Clamped to block 0 at j == 0 and zero-masked in-kernel (== the causal pad).
            pl.BlockSpec((1, c_in, _LANE),
                         lambda i, j: (i, 0, jnp.maximum(j * r - 1, 0))),
            # The tile itself.
            pl.BlockSpec((1, c_in, tl_), lambda i, j: (i, 0, j)),
            # 128-wide block just right of the tile (its first `halo-pad` cols are the
            # right halo). Clamped at the end; clamped data only feeds out-of-range
            # output columns which are never written back.
            pl.BlockSpec((1, c_in, _LANE),
                         lambda i, j: (i, 0, jnp.minimum((j + 1) * r, nsp - 1))),
            w_spec,
            b_spec,
        ],
        out_specs=pl.BlockSpec((1, c_out, tl_), lambda i, j: (i, 0, j)),
        compiler_params=pltpu.CompilerParams(
            dimension_semantics=("parallel", "parallel"),
            vmem_limit_bytes=vmem_limit,
        ),
    )(x, x, x, w2, b2)


def _reference(x, weight, bias, *, dilation=1):
    k = weight.shape[-1]
    pad = dilation * (k - 1) // 2
    x_pad = jnp.pad(x, ((0, 0), (0, 0), (pad, 0)))
    y = lax.conv_general_dilated(
        x_pad, weight, window_strides=(1,), padding="VALID",
        rhs_dilation=(dilation,),
        dimension_numbers=("NCH", "OIH", "NCH"))
    return y + bias[None, :, None]


def _run_case(key, *, n, c_in, c_out, l, k, dilation, seq_tile):
    kx, kw, kb = jax.random.split(key, 3)
    x = jax.random.normal(kx, (n, c_in, l), dtype=jnp.float32)
    bound = 1.0 / math.sqrt(c_in * k)
    weight = jax.random.uniform(kw, (c_out, c_in, k), jnp.float32, -bound, bound)
    bias = jax.random.uniform(kb, (c_out,), jnp.float32, -bound, bound)

    y = causal_conv1d(x, weight, bias, dilation=dilation, seq_tile=seq_tile)
    jax.block_until_ready(y)

    y_ref = _reference(x, weight, bias, dilation=dilation)
    assert y.shape == y_ref.shape, (y.shape, y_ref.shape)
    assert jnp.allclose(y, y_ref, atol=1e-4, rtol=1e-4), \
        float(jnp.max(jnp.abs(y - y_ref)))


if __name__ == "__main__":
    key = jax.random.PRNGKey(0)
    k1, k2 = jax.random.split(key)
    # Primary small case (same as the module's toy setup): single-L-tile path.
    _run_case(k1, n=2, c_in=4, c_out=8, l=16, k=3, dilation=1, seq_tile=512)
    # Slightly longer, dilated case: exercises the tiled grid=(N, L/TL) path with halo views.
    _run_case(k2, n=2, c_in=8, c_out=16, l=258, k=3, dilation=2, seq_tile=128)
    print("KERNEL_OK")
</pallas_src>

<mosaic_0001>
module attributes {stable_mosaic.version = 11 : i64} {
  func.func @_kernel_single(%arg0: i32, %arg1: memref<1x4x16xf32, #tpu.memory_space<vmem>>, %arg2: memref<8x12xf32, #tpu.memory_space<vmem>>, %arg3: memref<8x1xf32, #tpu.memory_space<vmem>>, %arg4: memref<1x8x15xf32, #tpu.memory_space<vmem>>) attributes {dimension_semantics = [#tpu.dimension_semantics<parallel>], iteration_bounds = array<i64: 2>, scalar_prefetch = 0 : i64, scratch_operands = 0 : i64, tpu.core_type = #tpu.core_type<tc>, window_params = [{transform_indices = @transform_0, window_bounds = array<i64: 1, 4, 16>}, {pipeline_mode = #tpu.pipeline_mode<synchronous>, transform_indices = @transform_1, window_bounds = array<i64: 8, 12>}, {pipeline_mode = #tpu.pipeline_mode<synchronous>, transform_indices = @transform_2, window_bounds = array<i64: 8, 1>}, {transform_indices = @transform_3, window_bounds = array<i64: 1, 8, 15>}]} {
    %c0 = arith.constant 0 : index
    %c0_0 = arith.constant 0 : index
    %c0_1 = arith.constant 0 : index
    %0 = vector.load %arg1[%c0, %c0_0, %c0_1] : memref<1x4x16xf32, #tpu.memory_space<vmem>>, vector<1x4x16xf32>
    %1 = vector.shape_cast %0 : vector<1x4x16xf32> to vector<4x16xf32>
    %cst = arith.constant 0.000000e+00 : f32
    %2 = vector.broadcast %cst : f32 to vector<4x1xf32>
    %3 = tpu.concatenate %2, %1 in 1 : vector<4x1xf32>, vector<4x16xf32> -> vector<4x17xf32>
    %4 = vector.extract_strided_slice %3 {offsets = [0, 0], sizes = [4, 15], strides = [1, 1]} : vector<4x17xf32> to vector<4x15xf32>
    %5 = vector.extract_strided_slice %3 {offsets = [0, 1], sizes = [4, 15], strides = [1, 1]} : vector<4x17xf32> to vector<4x15xf32>
    %6 = vector.extract_strided_slice %3 {offsets = [0, 2], sizes = [4, 15], strides = [1, 1]} : vector<4x17xf32> to vector<4x15xf32>
    %7 = tpu.concatenate %4, %5, %6 in 0 : vector<4x15xf32>, vector<4x15xf32>, vector<4x15xf32> -> vector<12x15xf32>
    %c0_2 = arith.constant 0 : index
    %c0_3 = arith.constant 0 : index
    %8 = vector.load %arg2[%c0_2, %c0_3] : memref<8x12xf32, #tpu.memory_space<vmem>>, vector<8x12xf32>
    %cst_4 = arith.constant dense<0.000000e+00> : vector<8x15xf32>
    %9 = tpu.matmul %8, %7, %cst_4 {dimension_numbers = #tpu.dot_dimension_numbers<[1], [0], [0], [1], [0, 0, 1, 1], [], []>} : vector<8x12xf32>, vector<12x15xf32>, vector<8x15xf32> -> vector<8x15xf32>
    %c0_5 = arith.constant 0 : index
    %c0_6 = arith.constant 0 : index
    %10 = vector.load %arg3[%c0_5, %c0_6] : memref<8x1xf32, #tpu.memory_space<vmem>>, vector<8x1xf32>
    %11 = vector.broadcast %10 : vector<8x1xf32> to vector<8x15xf32>
    %12 = arith.addf %9, %11 : vector<8x15xf32>
    %c0_7 = arith.constant 0 : index
    %c0_8 = arith.constant 0 : index
    %c0_9 = arith.constant 0 : index
    %13 = vector.load %arg4[%c0_7, %c0_8, %c0_9] : memref<1x8x15xf32, #tpu.memory_space<vmem>>, vector<1x8x15xf32>
    %14 = vector.shape_cast %13 : vector<1x8x15xf32> to vector<8x15xf32>
    %15 = vector.shape_cast %12 : vector<8x15xf32> to vector<1x8x15xf32>
    tpu.vector_store %arg4[%c0_7, %c0_8, %c0_9], %15 {strides = array<i32>} : memref<1x8x15xf32, #tpu.memory_space<vmem>>, vector<1x8x15xf32>,
    return
  }
  func.func @transform_0(%arg0: i32) -> (i32, i32, i32) {
    %c0_i32 = arith.constant 0 : i32
    %c0_i32_0 = arith.constant 0 : i32
    %c0_i32_1 = arith.constant 0 : i32
    return %arg0, %c0_i32, %c0_i32_0 : i32, i32, i32
  }
  func.func @transform_1(%arg0: i32) -> (i32, i32) {
    %c0_i32 = arith.constant 0 : i32
    %c0_i32_0 = arith.constant 0 : i32
    %c0_i32_1 = arith.constant 0 : i32
    return %c0_i32, %c0_i32_0 : i32, i32
  }
  func.func @transform_2(%arg0: i32) -> (i32, i32) {
    %c0_i32 = arith.constant 0 : i32
    %c0_i32_0 = arith.constant 0 : i32
    %c0_i32_1 = arith.constant 0 : i32
    return %c0_i32, %c0_i32_0 : i32, i32
  }
  func.func @transform_3(%arg0: i32) -> (i32, i32, i32) {
    %c0_i32 = arith.constant 0 : i32
    %c0_i32_0 = arith.constant 0 : i32
    %c0_i32_1 = arith.constant 0 : i32
    return %arg0, %c0_i32, %c0_i32_0 : i32, i32, i32
  }
}

</mosaic_0001>

<llo_original>
// kernel: tpu_custom_call.1
$region0: #{tpu_custom_call.1}
  #allocation0 [shape = 'u32[]', space=smem, size = 0x4, offset = 0x4, fixed_abs, tag = 'smem constant byte address 0x4 - core index']
  #allocation1 [shape = 'u32[72,128]{1,0:T(1,128)}', space=vmem, size = 0x9000, scoped, tag = 'internal scratch']
  %s0 = inlined_call_operand.vmem [shape: f32[2,4,16], index: 0, kind: input, shape index: {}]
  %s1 = inlined_call_operand.hbm [shape: f32[8,12], index: 1, kind: input, shape index: {}]
  %s2 = inlined_call_operand.vmem [shape: f32[8,1], index: 2, kind: input, shape index: {}]
  %s3 = inlined_call_operand.hbm [shape: f32[2,8,15], index: 3, kind: output, shape index: {}]
  %s4 = sld [smem:[#allocation0]]
  $region49: #{tpu_custom_call.1} parent=0
    _
  %s6 = ssub.s32 1, %s4
  %s7 = scalar_select 0, %s6, %s4
  $region1: #{tpu_custom_call.1} parent=0
    #allocation2 [shape = 'u8[4096]{0}', space=vmem, size = 0x1000, scoped, tag = 'input window, operand 1, single buffered']
    #allocation3 [shape = 's32[2]{0}', space=sflag, size = 0x8, scoped, tag = 'scoped memory for tpu_custom_call.1']
    #allocation4 [shape = 's32[2]{0}', space=sflag, size = 0x8, scoped, tag = 'scoped memory for tpu_custom_call.1']
    #allocation5 [shape = 'u8[8192]{0}', space=vmem, size = 0x2000, scoped, tag = 'output window, operand 0']
    %8 = vsyncpa [#allocation3], 0
    %9 = vsyncpa [#allocation4], 0
    %s10 = scalar_lea.sflag [#allocation4], 1
    %11 = vsyncpa %s10, 0
    loop: start=0, step=1, limit=4
    $region2: #{tpu_custom_call.1} parent=1 // loop_pre_header
      _
    $region3: #{tpu_custom_call.1} parent=1 // loop_header
      %s13 = sphi 0, %s17
      %p14 = scmp.ge.s32.totalorder %s13, 4
      %s23 = sphi 0, %s25
      %s26 = sphi 0, %s23
      %s27 = sphi 0, %s26
      %s43 = sphi 0, %s27
      %s47 = sphi 0, %s47
      %s49 = sphi 0, %s47
      %s50 = sphi 0, %s49
      %s64 = sphi 0, %s50
      %s68 = sphi 0, %s68
      %s70 = sphi 0, %s68
      %s71 = sphi 0, %s70
      %s85 = sphi 0, %s71
      %s91 = sphi 0, %s93
      %s94 = sphi 0, %s91
      %s95 = sphi 0, %s94
      %s111 = sphi 0, %s95
    $region4: #{tpu_custom_call.1} parent=1 // loop_header_branch
      %16 = sbr.rel (%p14) target = $region8
    $region5: #{tpu_custom_call.1} parent=1 // loop_body
      %s18 = ssub.s32 %s13, 1
      %s19 = ssub.s32 %s13, 2
      %s20 = sadd.s32 %s13, 1
      %s21 = ssub.s32 %s13, %s20
      %p22 = scmp.eq.s32.totalorder %s21, 0
      %s24 = sadd.s32 %s23, 1
      %s25 = scalar_select %p22, %s23, %s24
      %p28 = pneg %p22
      %p29 = scmp.eq.s32.totalorder %s13, 1
      %p30 = por %p28, %p29
      %p31 = scmp.ne.s32.totalorder %s23, %s26
      %p32 = scmp.eq.s32.totalorder %s13, 0
      %p33 = por %p31, %p32
      %p34 = scmp.ne.s32.totalorder %s23, %s26
      %p35 = scmp.eq.s32.totalorder %s18, 1
      %p36 = por %p34, %p35
      %p37 = scmp.ne.s32.totalorder %s26, %s27
      %p38 = scmp.eq.s32.totalorder %s18, 0
      %p39 = por %p37, %p38
      %p40 = scmp.ne.s32.totalorder %s26, %s27
      %p41 = scmp.eq.s32.totalorder %s19, 1
      %p42 = por %p40, %p41
      %p44 = scmp.ne.s32.totalorder %s27, %s43
      %p45 = scmp.eq.s32.totalorder %s19, 0
      %p46 = por %p44, %p45
      %s48 = sadd.s32 %s47, 1
      %p51 = scmp.eq.s32.totalorder %s13, 1
      %p52 = scmp.ne.s32.totalorder %s47, %s49
      %p53 = scmp.eq.s32.totalorder %s13, 0
      %p54 = por %p52, %p53
      %p55 = scmp.ne.s32.totalorder %s47, %s49
      %p56 = scmp.eq.s32.totalorder %s18, 1
      %p57 = por %p55, %p56
      %p58 = scmp.ne.s32.totalorder %s49, %s50
      %p59 = scmp.eq.s32.totalorder %s18, 0
      %p60 = por %p58, %p59
      %p61 = scmp.ne.s32.totalorder %s49, %s50
      %p62 = scmp.eq.s32.totalorder %s19, 1
      %p63 = por %p61, %p62
      %p65 = scmp.ne.s32.totalorder %s50, %s64
      %p66 = scmp.eq.s32.totalorder %s19, 0
      %p67 = por %p65, %p66
      %s69 = sadd.s32 %s68, 1
      %p72 = scmp.eq.s32.totalorder %s13, 1
      %p73 = scmp.ne.s32.totalorder %s68, %s70
      %p74 = scmp.eq.s32.totalorder %s13, 0
      %p75 = por %p73, %p74
      %p76 = scmp.ne.s32.totalorder %s68, %s70
      %p77 = scmp.eq.s32.totalorder %s18, 1
      %p78 = por %p76, %p77
      %p79 = scmp.ne.s32.totalorder %s70, %s71
      %p80 = scmp.eq.s32.totalorder %s18, 0
      %p81 = por %p79, %p80
      %p82 = scmp.ne.s32.totalorder %s70, %s71
      %p83 = scmp.eq.s32.totalorder %s19, 1
      %p84 = por %p82, %p83
      %p86 = scmp.ne.s32.totalorder %s71, %s85
      %p87 = scmp.eq.s32.totalorder %s19, 0
      %p88 = por %p86, %p87
      %s89 = ssub.s32 %s13, %s20
      %p90 = scmp.eq.s32.totalorder %s89, 0
      %s92 = sadd.s32 %s91, 1
      %s93 = scalar_select %p90, %s91, %s92
      %p96 = pneg %p90
      %p97 = scmp.eq.s32.totalorder %s13, 1
      %p98 = por %p96, %p97
      %p99 = scmp.ne.s32.totalorder %s91, %s94
      %p100 = scmp.eq.s32.totalorder %s13, 0
      %p101 = por %p99, %p100
      %p102 = scmp.ne.s32.totalorder %s91, %s94
      %p103 = scmp.eq.s32.totalorder %s18, 1
      %p104 = por %p102, %p103
      %p105 = scmp.ne.s32.totalorder %s94, %s95
      %p106 = scmp.eq.s32.totalorder %s18, 0
      %p107 = por %p105, %p106
      %p108 = scmp.ne.s32.totalorder %s94, %s95
      %p109 = scmp.eq.s32.totalorder %s19, 1
      %p110 = por %p108, %p109
      %p112 = scmp.ne.s32.totalorder %s95, %s111
      %p113 = scmp.eq.s32.totalorder %s19, 0
      %p114 = por %p112, %p113
      %p115 = scmp.le.s32.totalorder 1, %s13
      %p116 = scmp.lt.s32.totalorder %s13, 3
      %p117 = pnand %p115, %p116
      %p118 = pneg %p117
      // Predicated region
      $region9: #{tpu_custom_call.1} parent=5 // pred_check
        _
      $region10: #{tpu_custom_call.1} parent=5 // pred_check_branch
        %120 = sbr.rel (%p117) target = $region12
      $region11: #{tpu_custom_call.1} parent=5 // pred_region
        %s121 = ssub.s32 %s13, 1
        // Predicated region
        $region13: #{tpu_custom_call.1} parent=11 // pred_check
          %p122 = pneg %p60
        $region14: #{tpu_custom_call.1} parent=11 // pred_check_branch
          %124 = sbr.rel (%p122) target = $region16
        $region15: #{tpu_custom_call.1} parent=11 // pred_region
          %126 = vsyncadd [#allocation3], 0
          %s128 = sshll.u32 %s1, 4
          %s129 = int_to_ptr.hbm [resolvable:$true] %s128
          %s130 = sshll.u32 [#allocation2], 4
          %s131 = int_to_ptr.vmem [resolvable:$true] %s130
          %133 = dma.hbm_to_vmem [thread:$0]  %s129, 128, %s131, [#allocation3]
        $region16: #{tpu_custom_call.1} parent=11 // pred_fallthru
          _
        // Predicated region
        $region17: #{tpu_custom_call.1} parent=11 // pred_check
          %p134 = pneg %p81
        $region18: #{tpu_custom_call.1} parent=11 // pred_check_branch
          %136 = sbr.rel (%p134) target = $region20
        $region19: #{tpu_custom_call.1} parent=11 // pred_region
          _
        $region20: #{tpu_custom_call.1} parent=11 // pred_fallthru
          _
      $region12: #{tpu_custom_call.1} parent=5 // pred_fallthru
        _
      %p137 = scmp.lt.s32.totalorder %s13, 2
      // Predicated region
      $region21: #{tpu_custom_call.1} parent=5 // pred_check
        %p138 = pneg %p137
      $region22: #{tpu_custom_call.1} parent=5 // pred_check_branch
        %140 = sbr.rel (%p138) target = $region24
      $region23: #{tpu_custom_call.1} parent=5 // pred_region
        // Predicated region
        $region25: #{tpu_custom_call.1} parent=23 // pred_check
          %p141 = pneg %p33
        $region26: #{tpu_custom_call.1} parent=23 // pred_check_branch
          %143 = sbr.rel (%p141) target = $region28
        $region27: #{tpu_custom_call.1} parent=23 // pred_region
          %p144 = scmp.lt.s32.totalorder %s13, 1
          %s145 = scalar_select %p144, %s13, 1
          %s146 = smul.addr %s145, 4
          %s147 = scalar_lea.vmem %s0, %s146
        $region28: #{tpu_custom_call.1} parent=23 // pred_fallthru
          _
      $region24: #{tpu_custom_call.1} parent=5 // pred_fallthru
        _
      %p148 = scmp.le.s32.totalorder 1, %s13
      %p149 = scmp.lt.s32.totalorder %s13, 3
      %p150 = pnand %p148, %p149
      %p151 = pneg %p150
      // Predicated region
      $region29: #{tpu_custom_call.1} parent=5 // pred_check
        _
      $region30: #{tpu_custom_call.1} parent=5 // pred_check_branch
        %153 = sbr.rel (%p150) target = $region32
      $region31: #{tpu_custom_call.1} parent=5 // pred_region
        %s154 = ssub.s32 %s13, 1
        // Predicated region
        $region33: #{tpu_custom_call.1} parent=31 // pred_check
          %p155 = pneg %p60
        $region34: #{tpu_custom_call.1} parent=31 // pred_check_branch
          %157 = sbr.rel (%p155) target = $region36
        $region35: #{tpu_custom_call.1} parent=31 // pred_region
          %159 = dma.done [#allocation3], 128
        $region36: #{tpu_custom_call.1} parent=31 // pred_fallthru
          _
        %p160 = scmp.lt.s32.totalorder %s18, 1
        %s161 = scalar_select %p160, %s18, 1
        %s162 = smul.addr %s161, 4
        %s163 = scalar_lea.vmem %s0, %s162
        %p164 = pneg %p39
        %p165 = pneg %p36
        %p166 = pneg %p60
        %p167 = pneg %p57
        %p168 = pneg %p81
        %p169 = pneg %p78
        %p170 = pneg %p107
        %p171 = pneg %p104
        %s172 = sand.u32 %s94, 1
        %s173 = scalar_lea.sflag [#allocation4], %s172
        %s174 = sand.u32 %s94, 1
        %s175 = smul.addr %s174, 8
        %s176 = scalar_lea.vmem [#allocation5], %s175
        %p177 = scmp.lt.s32.totalorder %s18, 1
        %s178 = scalar_select %p177, %s18, 1
        %s179 = smul.addr %s178, 4
        %s180 = scalar_lea.vmem %s0, %s179
        %v181 = vld [vmem:[%s180] sm:$0xf]
        %183 = vrot.lane.b32.xlu0 %v181, 1
        %v184 = vpop.permute.xlu0 %183
        %vm186 = vcmask 7168
        %v187 = vsel %vm186, 0.0, %v184
        %v189 = vrot.slane %v187, 4
        %190 = vrot.lane.b32.xlu0 %v189, 127
        %v191 = vpop.permute.xlu0 %190
        %193 = vrot.lane.b32.xlu0 %v187, 126
        %v194 = vpop.permute.xlu0 %193
        %vm195 = vcmask 1043456
        %v196 = vsel %vm195, %v187, %v191
        %v197 = vld [vmem:[#allocation2] sm:$0xff]
        %v198 = vld [vmem:[%s2] sm:$0xff]
        %200 = vset.pattern.permute.xlu0 0
        %201 = vperm.xlu0 %200, %v198
        %v202 = vpop.permute.xlu0 %201
        %vm204 = vcmask 97280
        %v206 = vsel %vm204, %v197, 0
        %v208 = vsel %vm195, %v194, 0
        %210 = vmatpush.msra.mxu0 0.0
        %211 = vmatpush.msra.mxu0 0.0
        %212 = vmatpush.msra.mxu0 0.0
        %213 = vmatpush.msra.mxu0 0.0
        %214 = vmatpush.msra.mxu0 0.0
        %215 = vmatpush.msra.mxu0 0.0
        %216 = vmatpush.msra.mxu0 0.0
        %217 = vmatpush.msra.mxu0 0.0
        %218 = vmatpush.msra.mxu0 0.0
        %219 = vmatpush.msra.mxu0 0.0
        %220 = vmatpush.msra.mxu0 0.0
        %221 = vmatpush.msra.mxu0 0.0
        %222 = vmatpush.msra.mxu0 0.0
        %223 = vmatpush.msra.mxu0 0.0
        %224 = vmatpush.msra.mxu0 %v208
        %225 = vmatpush.msra.mxu0 %v196
        %226 = vmatmul.f32.gmra.mxu0 %v206
        %v227 = vpop.f32.mrf.mxu0
        %v228 = vadd.f32 %v202, %v227
        %229 = vdwg.mxu0
        %vm230 = vcmask 121856
        %231 = vst.msk [vmem:[%s176] sm:$0xff] %vm230, %v228
        %s232 = sand.u32 %s94, 1
        %s233 = scalar_lea.sflag [#allocation4], %s232
        %s234 = sand.u32 %s94, 1
        %s235 = smul.addr %s234, 8
        %s236 = scalar_lea.vmem [#allocation5], %s235
        // Predicated region
        $region37: #{tpu_custom_call.1} parent=31 // pred_check
          %p237 = pneg %p104
        $region38: #{tpu_custom_call.1} parent=31 // pred_check_branch
          %239 = sbr.rel (%p237) target = $region40
        $region39: #{tpu_custom_call.1} parent=31 // pred_region
          %241 = vsyncadd %s233, 0
          %s242 = smul.addr %s18, 8
          %s243 = scalar_lea.hbm %s3, %s242
          %s245 = sshll.u32 %s236, 4
          %s246 = int_to_ptr.vmem [resolvable:$true] %s245
          %s247 = sshll.u32 %s243, 4
          %s248 = int_to_ptr.hbm [resolvable:$true] %s247
          %250 = dma.vmem_to_hbm [thread:$0]  %s246, 128, %s248, %s233
        $region40: #{tpu_custom_call.1} parent=31 // pred_fallthru
          _
      $region32: #{tpu_custom_call.1} parent=5 // pred_fallthru
        _
      %p251 = scmp.le.s32.totalorder 2, %s13
      // Predicated region
      $region41: #{tpu_custom_call.1} parent=5 // pred_check
        %p252 = pneg %p251
      $region42: #{tpu_custom_call.1} parent=5 // pred_check_branch
        %254 = sbr.rel (%p252) target = $region44
      $region43: #{tpu_custom_call.1} parent=5 // pred_region
        %s255 = ssub.s32 %s13, 2
        // Predicated region
        $region45: #{tpu_custom_call.1} parent=43 // pred_check
          %p256 = pneg %p110
        $region46: #{tpu_custom_call.1} parent=43 // pred_check_branch
          %258 = sbr.rel (%p256) target = $region48
        $region47: #{tpu_custom_call.1} parent=43 // pred_region
          %s259 = sand.u32 %s95, 1
          %s260 = scalar_lea.sflag [#allocation4], %s259
          %s261 = sand.u32 %s95, 1
          %s262 = smul.addr %s261, 8
          %s263 = scalar_lea.vmem [#allocation5], %s262
          %265 = dma.done %s260, 128
        $region48: #{tpu_custom_call.1} parent=43 // pred_fallthru
          _
      $region44: #{tpu_custom_call.1} parent=5 // pred_fallthru
        _
    $region6: #{tpu_custom_call.1} parent=1 // loop_footer
      %s17 = sadd.s32 1, %s13
    $region7: #{tpu_custom_call.1} parent=1 // loop_footer_branch
      %12 = sbr.rel target = $region3
    $region8: #{tpu_custom_call.1} parent=1 // loop_exit
      _
    %266 = vsyncpa [#allocation3], 1
    %s267 = scalar_lea.sflag [#allocation3], 1
    %268 = vsyncpa %s267, 1
    %269 = vsyncpa [#allocation4], 1
    %s270 = scalar_lea.sflag [#allocation4], 1
    %271 = vsyncpa %s270, 1

</llo_original>
